<compile_context>
chip_gen: v5e
topology: v5e:2x2
jax: 0.10.0
libtpu: 0.0.40
codegen_flags: <defaults>
</compile_context>

<pallas_src>
import functools

import numpy as np
import jax
import jax.numpy as jnp
from jax.experimental import pallas as pl
from jax.experimental.pallas import tpu as pltpu

# ----------------------------- problem sizes -----------------------------
B = 2                      # batch
C_IN = 3                   # image channels
H = W = 16                 # spatial
HW = H * W
WP = W + 2                 # zero-padded width
N_FEATURES = 32            # stand-in backbone feature width (timm n_features)
HIDDEN = 4096              # replaced classifier: Linear(n_features, 4096)
N_CLASS = 10               # implied by reshape(..., (B, 5, 10))
N_HEADS = 5
N_OUT = N_HEADS * N_CLASS  # 50
N_OUT_PAD = 128            # lane-dense padded head dimension
K_PATCH = 3 * 3 * C_IN     # 27 (reference im2col contraction)
K_ROW = 3 * WP * C_IN      # 162: dense contraction of the row-Toeplitz conv
N_LANES = W * N_FEATURES   # 512: conv output lanes, x-major / feature-minor
B_PAD = 8                  # sublane-padded batch (full-tile output store)


# ------------------------------ Pallas kernel -----------------------------
def enclassifier_kernel(xrows_ref, wrow_ref, bconv_ref, wcls_ref, bcls_ref,
                        out_ref, *, batch, h):
    # (1) backbone stand-in: 3x3 "same" conv as ONE bf16 matmul against the
    #     row-Toeplitz weight, + bias, + ReLU.           (B*H, W*F) f32
    z = jnp.dot(xrows_ref[...], wrow_ref[...],
                preferred_element_type=jnp.float32)
    z = jnp.maximum(z + bconv_ref[...], 0.0)

    # (2) per-image row pooling as a 0/1 block mask matmul (the 1/HW scale is
    #     folded into wcls offline; rows >= batch are all-zero padding).
    rows = batch * h
    r = jax.lax.broadcasted_iota(jnp.int32, (B_PAD, rows), 0)
    c = jax.lax.broadcasted_iota(jnp.int32, (B_PAD, rows), 1)
    pool = ((r < batch) & (c >= r * h) & (c < (r + 1) * h)).astype(jnp.float32)
    feat = jnp.dot(pool, z, preferred_element_type=jnp.float32)   # (8, W*F)

    # (3) classifier(4096) + 5 heads, folded offline into one lane-dense
    #     (W*F, 128) matmul; unmasked full (8, 128) tile store.
    out_ref[...] = jnp.dot(feat.astype(wcls_ref.dtype), wcls_ref[...],
                           preferred_element_type=jnp.float32) + bcls_ref[...]


# --------------------------- offline weight prep --------------------------
def fuse_params(params):
    """One-time parameter folding (off the hot path)."""
    wc, bc, w1, b1, w2, b2 = params

    # Row-Toeplitz conv weight: W_row[dy*WP*C + xx*C + c, x*F + f] =
    #   wc[(dy*3+dx)*C + c, f]  with  dx = xx - x in {0,1,2},  else 0.
    wc3 = np.asarray(wc, np.float32).reshape(3, 3, C_IN, N_FEATURES)
    wr = np.zeros((3, WP, C_IN, W, N_FEATURES), np.float32)
    for x in range(W):
        for dx in range(3):
            wr[:, x + dx, :, x, :] = wc3[:, dx, :, :]
    w_row = jnp.asarray(wr.reshape(K_ROW, N_LANES)).astype(jnp.bfloat16)

    # Conv bias tiled over the x-major lane layout (added in-kernel, pre-ReLU).
    b_conv = jnp.tile(jnp.asarray(bc, jnp.float32).reshape(1, N_FEATURES),
                      (1, W))                                      # (1, W*F)

    # classifier(4096) + 5 heads: no nonlinearity in between -> fold offline
    # at HIGHEST precision (runs once), then fold the 1/HW pool scale in,
    # pad 50 -> 128 lanes, and tile over x so pool+classify is one matmul.
    hi = jax.lax.Precision.HIGHEST
    w_fused = jnp.dot(w1, w2, precision=hi)                        # (F, 50)
    b_fused = jnp.dot(b1, w2, precision=hi) + b2                   # (1, 50)
    w_fused = jnp.pad(w_fused, ((0, 0), (0, N_OUT_PAD - N_OUT))) / HW
    b_fused = jnp.pad(b_fused, ((0, 0), (0, N_OUT_PAD - N_OUT)))
    w_cls = jnp.tile(w_fused, (W, 1)).astype(jnp.bfloat16)         # (W*F, 128)
    b_cls = b_fused.astype(jnp.float32)                            # (1, 128)
    return w_row, b_conv, w_cls, b_cls


# ------------------------------ wrapper ----------------------------------
@jax.jit
def en_classifier_forward(x_nchw, fused_params):
    w_row, b_conv, w_cls, b_cls = fused_params

    # Tiny layout prep (one small fusion, ~20 KB): NCHW -> NHWC, zero pad,
    # stack the 3 vertical taps on the lane axis.  The 3x3 spatial structure
    # lives in w_row, so no im2col patches intermediate is materialized.
    x = jnp.transpose(x_nchw, (0, 2, 3, 1))                          # NHWC
    xp = jnp.pad(x, ((0, 0), (1, 1), (1, 1), (0, 0)))                # (B,H+2,WP,C)
    taps = jnp.stack([xp[:, dy:dy + H] for dy in range(3)], axis=2)  # (B,H,3,WP,C)
    xrows = taps.reshape(B * H, K_ROW).astype(jnp.bfloat16)          # (32, 162)

    kernel = functools.partial(enclassifier_kernel, batch=B, h=H)
    vmem = pl.BlockSpec(memory_space=pltpu.MemorySpace.VMEM)
    flops = 2 * (B * H * K_ROW * N_LANES          # conv matmul
                 + B_PAD * B * H * N_LANES        # pool matmul
                 + B_PAD * N_LANES * N_OUT_PAD)   # classifier matmul
    bytes_accessed = (xrows.size * 2 + w_row.size * 2 + b_conv.size * 4
                      + w_cls.size * 2 + b_cls.size * 4
                      + B_PAD * N_OUT_PAD * 4)

    out_padded = pl.pallas_call(
        kernel,
        out_shape=jax.ShapeDtypeStruct((B_PAD, N_OUT_PAD), jnp.float32),
        in_specs=[vmem] * 5,
        out_specs=vmem,
        cost_estimate=pl.CostEstimate(flops=flops, transcendentals=0,
                                      bytes_accessed=bytes_accessed),
    )(xrows, w_row, b_conv, w_cls, b_cls)

    # Downstream must always slice the sublane/lane padding away.
    out = out_padded[:B, :N_OUT]
    return out.reshape(B, N_HEADS, N_CLASS)                          # (B, 5, 10)


# -------- pure-JAX reference (unfused path, mirrors the PyTorch module) ----
def im2col_3x3_same(x_nhwc):
    b, h, w, c = x_nhwc.shape
    xp = jnp.pad(x_nhwc, ((0, 0), (1, 1), (1, 1), (0, 0)))
    cols = [xp[:, dy:dy + h, dx:dx + w, :] for dy in range(3) for dx in range(3)]
    patches = jnp.stack(cols, axis=-2)                  # (B, H, W, 9, C)
    return patches.reshape(b * h * w, 9 * c)            # (B*HW, 9*C)


def reference_forward(x_nchw, params):
    wc, bc, w1, b1, w2, b2 = params
    x_nhwc = jnp.transpose(x_nchw, (0, 2, 3, 1))
    patches = im2col_3x3_same(x_nhwc)
    y = jnp.maximum(patches @ wc + bc, 0.0)
    feat = jnp.mean(y.reshape(B, HW, N_FEATURES), axis=1)
    h = feat @ w1 + b1
    out = h @ w2 + b2
    return out.reshape(B, N_HEADS, N_CLASS)


def make_params(key):
    ks = jax.random.split(key, 6)
    wc = 0.1 * jax.random.normal(ks[0], (K_PATCH, N_FEATURES), jnp.float32)
    bc = 0.1 * jax.random.normal(ks[1], (1, N_FEATURES), jnp.float32)
    w1 = 0.02 * jax.random.normal(ks[2], (N_FEATURES, HIDDEN), jnp.float32)
    b1 = 0.02 * jax.random.normal(ks[3], (1, HIDDEN), jnp.float32)
    # 5 head weights/biases concatenated along the output axis (== torch.cat)
    w2 = 0.02 * jax.random.normal(ks[4], (HIDDEN, N_OUT), jnp.float32)
    b2 = 0.02 * jax.random.normal(ks[5], (1, N_OUT), jnp.float32)
    return wc, bc, w1, b1, w2, b2


if __name__ == "__main__":
    key = jax.random.PRNGKey(0)
    kx, kp = jax.random.split(key)
    x = jax.random.normal(kx, (B, C_IN, H, W), jnp.float32)   # NCHW like PyTorch
    params = make_params(kp)
    fused = fuse_params(params)                               # offline fold

    out = en_classifier_forward(x, fused)
    jax.block_until_ready(out)

    ref = reference_forward(x, params)
    assert out.shape == (B, N_HEADS, N_CLASS)
    # bf16 MXU operands + the offline w1@w2 / pool-scale folds change the
    # rounding points vs. the two-step f32 reference; compare at that level.
    assert jnp.allclose(out, ref, atol=5e-3, rtol=5e-3), (
        float(jnp.max(jnp.abs(out - ref))))
    print("KERNEL_OK")
</pallas_src>

<mosaic_0001>
module attributes {stable_mosaic.version = 11 : i64} {
  func.func @enclassifier_kernel(%arg0: memref<32x162xbf16, #tpu.memory_space<vmem>>, %arg1: memref<162x512xbf16, #tpu.memory_space<vmem>>, %arg2: memref<1x512xf32, #tpu.memory_space<vmem>>, %arg3: memref<512x128xbf16, #tpu.memory_space<vmem>>, %arg4: memref<1x128xf32, #tpu.memory_space<vmem>>, %arg5: memref<8x128xf32, #tpu.memory_space<vmem>>) attributes {dimension_semantics = [], scalar_prefetch = 0 : i64, scratch_operands = 0 : i64, tpu.core_type = #tpu.core_type<tc>} {
    %c0 = arith.constant 0 : index
    %c0_0 = arith.constant 0 : index
    %0 = vector.load %arg0[%c0, %c0_0] : memref<32x162xbf16, #tpu.memory_space<vmem>>, vector<32x162xbf16>
    %c0_1 = arith.constant 0 : index
    %c0_2 = arith.constant 0 : index
    %1 = vector.load %arg1[%c0_1, %c0_2] : memref<162x512xbf16, #tpu.memory_space<vmem>>, vector<162x512xbf16>
    %cst = arith.constant dense<0.000000e+00> : vector<32x512xf32>
    %2 = tpu.matmul %0, %1, %cst {dimension_numbers = #tpu.dot_dimension_numbers<[1], [0], [0], [1], [0, 0, 1, 1], [], []>} : vector<32x162xbf16>, vector<162x512xbf16>, vector<32x512xf32> -> vector<32x512xf32>
    %c0_3 = arith.constant 0 : index
    %c0_4 = arith.constant 0 : index
    %3 = vector.load %arg2[%c0_3, %c0_4] : memref<1x512xf32, #tpu.memory_space<vmem>>, vector<1x512xf32>
    %4 = vector.broadcast %3 : vector<1x512xf32> to vector<32x512xf32>
    %5 = arith.addf %2, %4 : vector<32x512xf32>
    %cst_5 = arith.constant 0.000000e+00 : f32
    %6 = vector.broadcast %cst_5 : f32 to vector<32x512xf32>
    %7 = arith.maximumf %5, %6 : vector<32x512xf32>
    %8 = tpu.iota {dimensions = array<i32: 0>} : vector<8x32xi32>
    %9 = tpu.iota {dimensions = array<i32: 1>} : vector<8x32xi32>
    %c2_i32 = arith.constant 2 : i32
    %10 = vector.broadcast %c2_i32 : i32 to vector<8x32xi32>
    %11 = arith.cmpi slt, %8, %10 : vector<8x32xi32>
    %c16_i32 = arith.constant 16 : i32
    %12 = vector.broadcast %c16_i32 : i32 to vector<8x32xi32>
    %13 = arith.muli %8, %12 : vector<8x32xi32>
    %14 = arith.cmpi sge, %9, %13 : vector<8x32xi32>
    %15 = arith.andi %11, %14 : vector<8x32xi1>
    %c1_i32 = arith.constant 1 : i32
    %16 = vector.broadcast %c1_i32 : i32 to vector<8x32xi32>
    %17 = arith.addi %8, %16 : vector<8x32xi32>
    %c16_i32_6 = arith.constant 16 : i32
    %18 = vector.broadcast %c16_i32_6 : i32 to vector<8x32xi32>
    %19 = arith.muli %17, %18 : vector<8x32xi32>
    %20 = arith.cmpi slt, %9, %19 : vector<8x32xi32>
    %21 = arith.andi %15, %20 : vector<8x32xi1>
    %22 = arith.extui %21 : vector<8x32xi1> to vector<8x32xi32>
    %23 = arith.sitofp %22 : vector<8x32xi32> to vector<8x32xf32>
    %cst_7 = arith.constant dense<0.000000e+00> : vector<8x512xf32>
    %24 = tpu.matmul %23, %7, %cst_7 {dimension_numbers = #tpu.dot_dimension_numbers<[1], [0], [0], [1], [0, 0, 1, 1], [], []>} : vector<8x32xf32>, vector<32x512xf32>, vector<8x512xf32> -> vector<8x512xf32>
    %25 = arith.truncf %24 : vector<8x512xf32> to vector<8x512xbf16>
    %c0_8 = arith.constant 0 : index
    %c0_9 = arith.constant 0 : index
    %26 = vector.load %arg3[%c0_8, %c0_9] : memref<512x128xbf16, #tpu.memory_space<vmem>>, vector<512x128xbf16>
    %cst_10 = arith.constant dense<0.000000e+00> : vector<8x128xf32>
    %27 = tpu.matmul %25, %26, %cst_10 {dimension_numbers = #tpu.dot_dimension_numbers<[1], [0], [0], [1], [0, 0, 1, 1], [], []>} : vector<8x512xbf16>, vector<512x128xbf16>, vector<8x128xf32> -> vector<8x128xf32>
    %c0_11 = arith.constant 0 : index
    %c0_12 = arith.constant 0 : index
    %28 = vector.load %arg4[%c0_11, %c0_12] : memref<1x128xf32, #tpu.memory_space<vmem>>, vector<1x128xf32>
    %29 = vector.broadcast %28 : vector<1x128xf32> to vector<8x128xf32>
    %30 = arith.addf %27, %29 : vector<8x128xf32>
    %c0_13 = arith.constant 0 : index
    %c0_14 = arith.constant 0 : index
    %31 = vector.load %arg5[%c0_13, %c0_14] : memref<8x128xf32, #tpu.memory_space<vmem>>, vector<8x128xf32>
    tpu.vector_store %arg5[%c0_13, %c0_14], %30 {strides = array<i32>} : memref<8x128xf32, #tpu.memory_space<vmem>>, vector<8x128xf32>,
    return
  }
}

</mosaic_0001>

<llo_original>
// kernel: en_classifier_forward.1
$region0: #{en_classifier_forward.1}
  #allocation0 [shape = 'u32[]', space=smem, size = 0x4, offset = 0x4, fixed_abs, tag = 'smem constant byte address 0x4 - core index']
  #allocation1 [shape = 'u32[72,128]{1,0:T(1,128)}', space=vmem, size = 0x9000, scoped, tag = 'internal scratch']
  %s0 = inlined_call_operand.vmem [shape: bf16[32,162], index: 0, kind: input, shape index: {}]
  %s1 = inlined_call_operand.vmem [shape: bf16[162,512], index: 1, kind: input, shape index: {}]
  %s2 = inlined_call_operand.vmem [shape: f32[1,512], index: 2, kind: input, shape index: {}]
  %s3 = inlined_call_operand.vmem [shape: bf16[512,128], index: 3, kind: input, shape index: {}]
  %s4 = inlined_call_operand.vmem [shape: f32[1,128], index: 4, kind: input, shape index: {}]
  %s5 = inlined_call_operand.vmem [shape: f32[8,128], index: 5, kind: output, shape index: {}]
  %s6 = sld [smem:[#allocation0]]
  $region30: #{en_classifier_forward.1} parent=0
    _
  %s8 = ssub.s32 1, %s6
  %s9 = scalar_select 0, %s8, %s6
  // Predicated region
  $region2: #{en_classifier_forward.1} parent=0 // pred_check
    _
  $region3: #{en_classifier_forward.1} parent=0 // pred_check_branch
    %11 = sbr.rel (0) target = $region5
  $region4: #{en_classifier_forward.1} parent=0 // pred_region
    _
  $region5: #{en_classifier_forward.1} parent=0 // pred_fallthru
    _
  // Predicated region
  $region6: #{en_classifier_forward.1} parent=0 // pred_check
    _
  $region7: #{en_classifier_forward.1} parent=0 // pred_check_branch
    %13 = sbr.rel (0) target = $region9
  $region8: #{en_classifier_forward.1} parent=0 // pred_region
    _
  $region9: #{en_classifier_forward.1} parent=0 // pred_fallthru
    _
  // Predicated region
  $region10: #{en_classifier_forward.1} parent=0 // pred_check
    _
  $region11: #{en_classifier_forward.1} parent=0 // pred_check_branch
    %15 = sbr.rel (0) target = $region13
  $region12: #{en_classifier_forward.1} parent=0 // pred_region
    _
  $region13: #{en_classifier_forward.1} parent=0 // pred_fallthru
    _
  // Predicated region
  $region14: #{en_classifier_forward.1} parent=0 // pred_check
    _
  $region15: #{en_classifier_forward.1} parent=0 // pred_check_branch
    %17 = sbr.rel (0) target = $region17
  $region16: #{en_classifier_forward.1} parent=0 // pred_region
    _
  $region17: #{en_classifier_forward.1} parent=0 // pred_fallthru
    _
  // Predicated region
  $region18: #{en_classifier_forward.1} parent=0 // pred_check
    _
  $region19: #{en_classifier_forward.1} parent=0 // pred_check_branch
    %19 = sbr.rel (0) target = $region21
  $region20: #{en_classifier_forward.1} parent=0 // pred_region
    _
  $region21: #{en_classifier_forward.1} parent=0 // pred_fallthru
    _
  %v21 = vld [vmem:[%s0] sm:$0xff]
  %v22 = vld [vmem:[%s0 + $0x8] sm:$0xff]
  %v23 = vld [vmem:[%s0 + $0x10] sm:$0xff]
  %v24 = vld [vmem:[%s0 + $0x18] sm:$0xff]
  %v25 = vld [vmem:[%s1] sm:$0xff]
  %v26 = vld [vmem:[%s1 + $0x8] sm:$0xff]
  %v27 = vld [vmem:[%s1 + $0x10] sm:$0xff]
  %v28 = vld [vmem:[%s1 + $0x18] sm:$0xff]
  %v29 = vld [vmem:[%s1 + $0x20] sm:$0xff]
  %v30 = vld [vmem:[%s1 + $0x28] sm:$0xff]
  %v31 = vld [vmem:[%s1 + $0x30] sm:$0xff]
  %v32 = vld [vmem:[%s1 + $0x38] sm:$0xff]
  %v33 = vld [vmem:[%s1 + $0x40] sm:$0xff]
  %v34 = vld [vmem:[%s1 + $0x48] sm:$0xff]
  %v35 = vld [vmem:[%s1 + $0x50] sm:$0xff]
  %v36 = vld [vmem:[%s1 + $0x58] sm:$0xff]
  %v37 = vld [vmem:[%s1 + $0x60] sm:$0xff]
  %v38 = vld [vmem:[%s1 + $0x68] sm:$0xff]
  %v39 = vld [vmem:[%s1 + $0x70] sm:$0xff]
  %v40 = vld [vmem:[%s1 + $0x78] sm:$0xff]
  %v41 = vld [vmem:[%s1 + $0x80] sm:$0xff]
  %v42 = vld [vmem:[%s1 + $0x88] sm:$0xff]
  %v43 = vld [vmem:[%s1 + $0x90] sm:$0xff]
  %v44 = vld [vmem:[%s1 + $0x98] sm:$0xff]
  %v45 = vld [vmem:[%s1 + $0xa0] sm:$0xff]
  %v46 = vld [vmem:[%s1 + $0xa8] sm:$0xff]
  %v47 = vld [vmem:[%s1 + $0xb0] sm:$0xff]
  %v48 = vld [vmem:[%s1 + $0xb8] sm:$0xff]
  %v49 = vld [vmem:[%s1 + $0xc0] sm:$0xff]
  %v50 = vld [vmem:[%s1 + $0xc8] sm:$0xff]
  %v51 = vld [vmem:[%s1 + $0xd0] sm:$0xff]
  %v52 = vld [vmem:[%s1 + $0xd8] sm:$0xff]
  %v53 = vld [vmem:[%s1 + $0xe0] sm:$0xff]
  %v54 = vld [vmem:[%s1 + $0xe8] sm:$0xff]
  %v55 = vld [vmem:[%s1 + $0xf0] sm:$0xff]
  %v56 = vld [vmem:[%s1 + $0xf8] sm:$0xff]
  %v57 = vld [vmem:[%s1 + $0x100] sm:$0xff]
  %v58 = vld [vmem:[%s1 + $0x108] sm:$0xff]
  %v59 = vld [vmem:[%s1 + $0x110] sm:$0xff]
  %v60 = vld [vmem:[%s1 + $0x118] sm:$0xff]
  %v61 = vld [vmem:[%s1 + $0x120] sm:$0xff]
  %v62 = vld [vmem:[%s1 + $0x128] sm:$0xff]
  %v63 = vld [vmem:[%s1 + $0x130] sm:$0xff]
  %v64 = vld [vmem:[%s1 + $0x138] sm:$0xff]
  %v65 = vld [vmem:[%s1 + $0x140] sm:$0x11]
  %v66 = vld [vmem:[%s1 + $0x148] sm:$0x11]
  %v67 = vld [vmem:[%s2] sm:$0xf]
  %v69 = vperm.slane %v67, 0
  %v70 = vperm.slane %v67, 1
  %v71 = vperm.slane %v67, 2
  %v72 = vperm.slane %v67, 3
  %v81 = vunpack.c.l.b16 %v21
  %v82 = vunpack.c.h.b16 %v21
  %v83 = vunpack.c.l.b16 %v22
  %v84 = vunpack.c.h.b16 %v22
  %v85 = vunpack.c.l.b16 %v23
  %v86 = vunpack.c.h.b16 %v23
  %v87 = vunpack.c.l.b16 %v24
  %v88 = vunpack.c.h.b16 %v24
  %v89 = vpack.c.b16 %v83, %v81
  %v90 = vpack.c.b16 %v84, %v82
  %v91 = vpack.c.b16 %v87, %v85
  %v92 = vpack.c.b16 %v88, %v86
  %v137 = vunpack.c.l.b16 %v25
  %v138 = vunpack.c.h.b16 %v25
  %v139 = vunpack.c.l.b16 %v26
  %v140 = vunpack.c.h.b16 %v26
  %v141 = vunpack.c.l.b16 %v27
  %v142 = vunpack.c.h.b16 %v27
  %v143 = vunpack.c.l.b16 %v28
  %v144 = vunpack.c.h.b16 %v28
  %v145 = vunpack.c.l.b16 %v29
  %v146 = vunpack.c.h.b16 %v29
  %v147 = vunpack.c.l.b16 %v30
  %v148 = vunpack.c.h.b16 %v30
  %v149 = vunpack.c.l.b16 %v31
  %v150 = vunpack.c.h.b16 %v31
  %v151 = vunpack.c.l.b16 %v32
  %v152 = vunpack.c.h.b16 %v32
  %v153 = vunpack.c.l.b16 %v33
  %v154 = vunpack.c.h.b16 %v33
  %v155 = vunpack.c.l.b16 %v34
  %v156 = vunpack.c.h.b16 %v34
  %v157 = vunpack.c.l.b16 %v35
  %v158 = vunpack.c.h.b16 %v35
  %v159 = vunpack.c.l.b16 %v36
  %v160 = vunpack.c.h.b16 %v36
  %v161 = vunpack.c.l.b16 %v37
  %v162 = vunpack.c.h.b16 %v37
  %v163 = vunpack.c.l.b16 %v38
  %v164 = vunpack.c.h.b16 %v38
  %v165 = vunpack.c.l.b16 %v39
  %v166 = vunpack.c.h.b16 %v39
  %v167 = vunpack.c.l.b16 %v40
  %v168 = vunpack.c.h.b16 %v40
  %v169 = vunpack.c.l.b16 %v41
  %v170 = vunpack.c.h.b16 %v41
  %v171 = vunpack.c.l.b16 %v42
  %v172 = vunpack.c.h.b16 %v42
  %v173 = vunpack.c.l.b16 %v43
  %v174 = vunpack.c.h.b16 %v43
  %v175 = vunpack.c.l.b16 %v44
  %v176 = vunpack.c.h.b16 %v44
  %v177 = vunpack.c.l.b16 %v45
  %v178 = vunpack.c.h.b16 %v45
  %v179 = vunpack.c.l.b16 %v46
  %v180 = vunpack.c.h.b16 %v46
  %v181 = vunpack.c.l.b16 %v47
  %v182 = vunpack.c.h.b16 %v47
  %v183 = vunpack.c.l.b16 %v48
  %v184 = vunpack.c.h.b16 %v48
  %v185 = vunpack.c.l.b16 %v49
  %v186 = vunpack.c.h.b16 %v49
  %v187 = vunpack.c.l.b16 %v50
  %v188 = vunpack.c.h.b16 %v50
  %v189 = vunpack.c.l.b16 %v51
  %v190 = vunpack.c.h.b16 %v51
  %v191 = vunpack.c.l.b16 %v52
  %v192 = vunpack.c.h.b16 %v52
  %v193 = vunpack.c.l.b16 %v53
  %v194 = vunpack.c.h.b16 %v53
  %v195 = vunpack.c.l.b16 %v54
  %v196 = vunpack.c.h.b16 %v54
  %v197 = vunpack.c.l.b16 %v55
  %v198 = vunpack.c.h.b16 %v55
  %v199 = vunpack.c.l.b16 %v56
  %v200 = vunpack.c.h.b16 %v56
  %v201 = vunpack.c.l.b16 %v57
  %v202 = vunpack.c.h.b16 %v57
  %v203 = vunpack.c.l.b16 %v58
  %v204 = vunpack.c.h.b16 %v58
  %v205 = vunpack.c.l.b16 %v59
  %v206 = vunpack.c.h.b16 %v59
  %v207 = vunpack.c.l.b16 %v60
  %v208 = vunpack.c.h.b16 %v60
  %v209 = vunpack.c.l.b16 %v61
  %v210 = vunpack.c.h.b16 %v61
  %v211 = vunpack.c.l.b16 %v62
  %v212 = vunpack.c.h.b16 %v62
  %v213 = vunpack.c.l.b16 %v63
  %v214 = vunpack.c.h.b16 %v63
  %v215 = vunpack.c.l.b16 %v64
  %v216 = vunpack.c.h.b16 %v64
  %v217 = vunpack.c.l.b16 %v65
  %v218 = vunpack.c.h.b16 %v65
  %v219 = vunpack.c.l.b16 %v66
  %v220 = vunpack.c.h.b16 %v66
  %v221 = vpack.c.b16 %v141, %v137
  %v222 = vpack.c.b16 %v142, %v138
  %v223 = vpack.c.b16 %v143, %v139
  %v224 = vpack.c.b16 %v144, %v140
  %v225 = vpack.c.b16 %v149, %v145
  %v226 = vpack.c.b16 %v150, %v146
  %v227 = vpack.c.b16 %v151, %v147
  %v228 = vpack.c.b16 %v152, %v148
  %v229 = vpack.c.b16 %v157, %v153
  %v230 = vpack.c.b16 %v158, %v154
  %v231 = vpack.c.b16 %v159, %v155
  %v232 = vpack.c.b16 %v160, %v156
  %v233 = vpack.c.b16 %v165, %v161
  %v234 = vpack.c.b16 %v166, %v162
  %v235 = vpack.c.b16 %v167, %v163
  %v236 = vpack.c.b16 %v168, %v164
  %v237 = vpack.c.b16 %v173, %v169
  %v238 = vpack.c.b16 %v174, %v170
  %v239 = vpack.c.b16 %v175, %v171
  %v240 = vpack.c.b16 %v176, %v172
  %v241 = vpack.c.b16 %v181, %v177
  %v242 = vpack.c.b16 %v182, %v178
  %v243 = vpack.c.b16 %v183, %v179
  %v244 = vpack.c.b16 %v184, %v180
  %v245 = vpack.c.b16 %v189, %v185
  %v246 = vpack.c.b16 %v190, %v186
  %v247 = vpack.c.b16 %v191, %v187
  %v248 = vpack.c.b16 %v192, %v188
  %v249 = vpack.c.b16 %v197, %v193
  %v250 = vpack.c.b16 %v198, %v194
  %v251 = vpack.c.b16 %v199, %v195
  %v252 = vpack.c.b16 %v200, %v196
  %v253 = vpack.c.b16 %v205, %v201
  %v254 = vpack.c.b16 %v206, %v202
  %v255 = vpack.c.b16 %v207, %v203
  %v256 = vpack.c.b16 %v208, %v204
  %v257 = vpack.c.b16 %v213, %v209
  %v258 = vpack.c.b16 %v214, %v210
  %v259 = vpack.c.b16 %v215, %v211
  %v260 = vpack.c.b16 %v216, %v212
  %v261 = vpack.c.b16 %v217, %v217
  %v262 = vpack.c.b16 %v218, %v218
  %v263 = vpack.c.b16 %v219, %v219
  %v264 = vpack.c.b16 %v220, %v220
  %vm305 = vcmask 277504
  %v307 = vsel %vm305, %v90, 0
  %v310 = vsel %vm305, %v92, 0
  %vm312 = vcmask 1040384
  %v314 = vsel %vm312, %v261, 0
  %v317 = vsel %vm312, %v262, 0
  %v320 = vsel %vm312, %v263, 0
  %v323 = vsel %vm312, %v264, 0
  %325 = vmatpush.bf16.msra.mxu0 %v249
  %326 = vmatpush.bf16.msra.mxu0 %v245
  %327 = vmatpush.bf16.msra.mxu0 %v241
  %328 = vmatpush.bf16.msra.mxu0 %v237
  %329 = vmatpush.bf16.msra.mxu0 %v233
  %330 = vmatpush.bf16.msra.mxu0 %v229
  %331 = vmatpush.bf16.msra.mxu0 %v225
  %332 = vmatpush.bf16.msra.mxu0 %v221
  %333 = vmatmul.bf16.gmra.mxu0 %v89
  %v334 = vpop.f32.mrf.mxu0
  %v335 = vadd.f32 %v69, %v334
  %v336 = vpop.f32.mrf.mxu0
  %v337 = vadd.f32 %v69, %v336
  %338 = vmatmul.bf16.gmra.mxu0 %v91
  %v339 = vpop.f32.mrf.mxu0
  %v340 = vadd.f32 %v69, %v339
  %v341 = vpop.f32.mrf.mxu0
  %v342 = vadd.f32 %v69, %v341
  %343 = vdwg.mxu0
  %344 = vmatpush.bf16.msra.mxu0 0
  %345 = vmatpush.bf16.msra.mxu0 0
  %346 = vmatpush.bf16.msra.mxu0 0
  %347 = vmatpush.bf16.msra.mxu0 0
  %348 = vmatpush.bf16.msra.mxu0 0
  %349 = vmatpush.bf16.msra.mxu0 %v314
  %350 = vmatpush.bf16.msra.mxu0 %v257
  %351 = vmatpush.bf16.msra.mxu0 %v253
  %352 = vmatmul.bf16.gmra.mxu0 %v307
  %v353 = vpop.f32.mrf.mxu0
  %v354 = vadd.f32 %v335, %v353
  %v355 = vpop.f32.mrf.mxu0
  %v356 = vadd.f32 %v337, %v355
  %357 = vmatmul.bf16.gmra.mxu0 %v310
  %v358 = vpop.f32.mrf.mxu0
  %v359 = vadd.f32 %v340, %v358
  %v360 = vpop.f32.mrf.mxu0
  %v361 = vadd.f32 %v342, %v360
  %362 = vdwg.mxu0
  %363 = vmatpush.bf16.msra.mxu0 %v250
  %364 = vmatpush.bf16.msra.mxu0 %v246
  %365 = vmatpush.bf16.msra.mxu0 %v242
  %366 = vmatpush.bf16.msra.mxu0 %v238
  %367 = vmatpush.bf16.msra.mxu0 %v234
  %368 = vmatpush.bf16.msra.mxu0 %v230
  %369 = vmatpush.bf16.msra.mxu0 %v226
  %370 = vmatpush.bf16.msra.mxu0 %v222
  %371 = vmatmul.bf16.gmra.mxu0 %v89
  %v372 = vpop.f32.mrf.mxu0
  %v373 = vadd.f32 %v70, %v372
  %v374 = vpop.f32.mrf.mxu0
  %v375 = vadd.f32 %v70, %v374
  %376 = vmatmul.bf16.gmra.mxu0 %v91
  %v377 = vpop.f32.mrf.mxu0
  %v378 = vadd.f32 %v70, %v377
  %v379 = vpop.f32.mrf.mxu0
  %v380 = vadd.f32 %v70, %v379
  %381 = vdwg.mxu0
  %382 = vmatpush.bf16.msra.mxu0 0
  %383 = vmatpush.bf16.msra.mxu0 0
  %384 = vmatpush.bf16.msra.mxu0 0
  %385 = vmatpush.bf16.msra.mxu0 0
  %386 = vmatpush.bf16.msra.mxu0 0
  %387 = vmatpush.bf16.msra.mxu0 %v317
  %388 = vmatpush.bf16.msra.mxu0 %v258
  %389 = vmatpush.bf16.msra.mxu0 %v254
  %390 = vmatmul.bf16.gmra.mxu0 %v307
  %v391 = vpop.f32.mrf.mxu0
  %v392 = vadd.f32 %v373, %v391
  %v393 = vpop.f32.mrf.mxu0
  %v394 = vadd.f32 %v375, %v393
  %395 = vmatmul.bf16.gmra.mxu0 %v310
  %v396 = vpop.f32.mrf.mxu0
  %v397 = vadd.f32 %v378, %v396
  %v398 = vpop.f32.mrf.mxu0
  %v399 = vadd.f32 %v380, %v398
  %400 = vdwg.mxu0
  %401 = vmatpush.bf16.msra.mxu0 %v251
  %402 = vmatpush.bf16.msra.mxu0 %v247
  %403 = vmatpush.bf16.msra.mxu0 %v243
  %404 = vmatpush.bf16.msra.mxu0 %v239
  %405 = vmatpush.bf16.msra.mxu0 %v235
  %406 = vmatpush.bf16.msra.mxu0 %v231
  %407 = vmatpush.bf16.msra.mxu0 %v227
  %408 = vmatpush.bf16.msra.mxu0 %v223
  %409 = vmatmul.bf16.gmra.mxu0 %v89
  %v410 = vpop.f32.mrf.mxu0
  %v411 = vadd.f32 %v71, %v410
  %v412 = vpop.f32.mrf.mxu0
  %v413 = vadd.f32 %v71, %v412
  %414 = vmatmul.bf16.gmra.mxu0 %v91
  %v415 = vpop.f32.mrf.mxu0
  %v416 = vadd.f32 %v71, %v415
  %v417 = vpop.f32.mrf.mxu0
  %v418 = vadd.f32 %v71, %v417
  %419 = vdwg.mxu0
  %420 = vmatpush.bf16.msra.mxu0 0
  %421 = vmatpush.bf16.msra.mxu0 0
  %422 = vmatpush.bf16.msra.mxu0 0
  %423 = vmatpush.bf16.msra.mxu0 0
  %424 = vmatpush.bf16.msra.mxu0 0
  %425 = vmatpush.bf16.msra.mxu0 %v320
  %426 = vmatpush.bf16.msra.mxu0 %v259
  %427 = vmatpush.bf16.msra.mxu0 %v255
  %428 = vmatmul.bf16.gmra.mxu0 %v307
  %v429 = vpop.f32.mrf.mxu0
  %v430 = vadd.f32 %v411, %v429
  %v431 = vpop.f32.mrf.mxu0
  %v432 = vadd.f32 %v413, %v431
  %433 = vmatmul.bf16.gmra.mxu0 %v310
  %v434 = vpop.f32.mrf.mxu0
  %v435 = vadd.f32 %v416, %v434
  %v436 = vpop.f32.mrf.mxu0
  %v437 = vadd.f32 %v418, %v436
  %438 = vdwg.mxu0
  %439 = vmatpush.bf16.msra.mxu0 %v252
  %440 = vmatpush.bf16.msra.mxu0 %v248
  %441 = vmatpush.bf16.msra.mxu0 %v244
  %442 = vmatpush.bf16.msra.mxu0 %v240
  %443 = vmatpush.bf16.msra.mxu0 %v236
  %444 = vmatpush.bf16.msra.mxu0 %v232
  %445 = vmatpush.bf16.msra.mxu0 %v228
  %446 = vmatpush.bf16.msra.mxu0 %v224
  %447 = vmatmul.bf16.gmra.mxu0 %v89
  %v448 = vpop.f32.mrf.mxu0
  %v449 = vadd.f32 %v72, %v448
  %v450 = vpop.f32.mrf.mxu0
  %v451 = vadd.f32 %v72, %v450
  %452 = vmatmul.bf16.gmra.mxu0 %v91
  %v453 = vpop.f32.mrf.mxu0
  %v454 = vadd.f32 %v72, %v453
  %v455 = vpop.f32.mrf.mxu0
  %v456 = vadd.f32 %v72, %v455
  %457 = vdwg.mxu0
  %458 = vmatpush.bf16.msra.mxu0 0
  %459 = vmatpush.bf16.msra.mxu0 0
  %460 = vmatpush.bf16.msra.mxu0 0
  %461 = vmatpush.bf16.msra.mxu0 0
  %462 = vmatpush.bf16.msra.mxu0 0
  %463 = vmatpush.bf16.msra.mxu0 %v323
  %464 = vmatpush.bf16.msra.mxu0 %v260
  %465 = vmatpush.bf16.msra.mxu0 %v256
  %466 = vmatmul.bf16.gmra.mxu0 %v307
  %v467 = vpop.f32.mrf.mxu0
  %v468 = vadd.f32 %v449, %v467
  %v469 = vpop.f32.mrf.mxu0
  %v470 = vadd.f32 %v451, %v469
  %471 = vmatmul.bf16.gmra.mxu0 %v310
  %v472 = vpop.f32.mrf.mxu0
  %v473 = vadd.f32 %v454, %v472
  %v474 = vpop.f32.mrf.mxu0
  %v475 = vadd.f32 %v456, %v474
  %476 = vdwg.mxu0
  %v477 = vmax.f32 %v354, 0.0
  %v478 = vmax.f32 %v392, 0.0
  %v479 = vmax.f32 %v430, 0.0
  %v480 = vmax.f32 %v468, 0.0
  %v481 = vmax.f32 %v356, 0.0
  %v482 = vmax.f32 %v394, 0.0
  %v483 = vmax.f32 %v432, 0.0
  %v484 = vmax.f32 %v470, 0.0
  %v485 = vmax.f32 %v359, 0.0
  %v486 = vmax.f32 %v397, 0.0
  %v487 = vmax.f32 %v435, 0.0
  %v488 = vmax.f32 %v473, 0.0
  %v489 = vmax.f32 %v361, 0.0
  %v490 = vmax.f32 %v399, 0.0
  %v491 = vmax.f32 %v437, 0.0
  %v492 = vmax.f32 %v475, 0.0
  %v493 = vlaneseq
  %v494 = vshrl.u32 %v493, 7
  %v495 = vlaneseq
  %v496 = vand.u32 %v495, 127
  %vm497 = vcmp.lt.s32.totalorder %v494, 2
  %v498 = vmul.u32 %v494, 16
  %vm499 = vcmp.ge.s32.totalorder %v496, %v498
  %vm500 = vmand %vm497, %vm499
  %v501 = vadd.s32 %v494, 1
  %v502 = vmul.u32 %v501, 16
  %vm503 = vcmp.lt.s32.totalorder %v496, %v502
  %vm504 = vmand %vm500, %vm503
  %v505 = vsel %vm504, 1, 0
  %v506 = vcvt.s32.f32 %v505
  %vm507 = vcmask 261120
  %v509 = vsel %vm507, %v506, 0
  %511 = vmatpush.msra.mxu0 0.0
  %512 = vmatpush.msra.mxu0 0.0
  %513 = vmatpush.msra.mxu0 0.0
  %514 = vmatpush.msra.mxu0 0.0
  %515 = vmatpush.msra.mxu0 0.0
  %516 = vmatpush.msra.mxu0 0.0
  %517 = vmatpush.msra.mxu0 0.0
  %518 = vmatpush.msra.mxu0 0.0
  %519 = vmatpush.msra.mxu0 0.0
  %520 = vmatpush.msra.mxu0 0.0
  %521 = vmatpush.msra.mxu0 0.0
  %522 = vmatpush.msra.mxu0 0.0
  %523 = vmatpush.msra.mxu0 %v489
  %524 = vmatpush.msra.mxu0 %v485
  %525 = vmatpush.msra.mxu0 %v481
  %526 = vmatpush.msra.mxu0 %v477
  %527 = vmatmul.f32.gmra.mxu0 %v509
  %v528 = vpop.f32.mrf.mxu0
  %v529 = vadd.f32 0.0, %v528
  %530 = vdwg.mxu0
  %531 = vmatpush.msra.mxu0 0.0
  %532 = vmatpush.msra.mxu0 0.0
  %533 = vmatpush.msra.mxu0 0.0
  %534 = vmatpush.msra.mxu0 0.0
  %535 = vmatpush.msra.mxu0 0.0
  %536 = vmatpush.msra.mxu0 0.0
  %537 = vmatpush.msra.mxu0 0.0
  %538 = vmatpush.msra.mxu0 0.0
  %539 = vmatpush.msra.mxu0 0.0
  %540 = vmatpush.msra.mxu0 0.0
  %541 = vmatpush.msra.mxu0 0.0
  %542 = vmatpush.msra.mxu0 0.0
  %543 = vmatpush.msra.mxu0 %v490
  %544 = vmatpush.msra.mxu0 %v486
  %545 = vmatpush.msra.mxu0 %v482
  %546 = vmatpush.msra.mxu0 %v478
  %547 = vmatmul.f32.gmra.mxu0 %v509
  %v548 = vpop.f32.mrf.mxu0
  %v549 = vadd.f32 0.0, %v548
  %550 = vdwg.mxu0
  %551 = vmatpush.msra.mxu0 0.0
  %552 = vmatpush.msra.mxu0 0.0
  %553 = vmatpush.msra.mxu0 0.0
  %554 = vmatpush.msra.mxu0 0.0
  %555 = vmatpush.msra.mxu0 0.0
  %556 = vmatpush.msra.mxu0 0.0
  %557 = vmatpush.msra.mxu0 0.0
  %558 = vmatpush.msra.mxu0 0.0
  %559 = vmatpush.msra.mxu0 0.0
  %560 = vmatpush.msra.mxu0 0.0
  %561 = vmatpush.msra.mxu0 0.0
  %562 = vmatpush.msra.mxu0 0.0
  %563 = vmatpush.msra.mxu0 %v491
  %564 = vmatpush.msra.mxu0 %v487
  %565 = vmatpush.msra.mxu0 %v483
  %566 = vmatpush.msra.mxu0 %v479
  %567 = vmatmul.f32.gmra.mxu0 %v509
  %v568 = vpop.f32.mrf.mxu0
  %v569 = vadd.f32 0.0, %v568
  %570 = vdwg.mxu0
  %571 = vmatpush.msra.mxu0 0.0
  %572 = vmatpush.msra.mxu0 0.0
  %573 = vmatpush.msra.mxu0 0.0
  %574 = vmatpush.msra.mxu0 0.0
  %575 = vmatpush.msra.mxu0 0.0
  %576 = vmatpush.msra.mxu0 0.0
  %577 = vmatpush.msra.mxu0 0.0
  %578 = vmatpush.msra.mxu0 0.0
  %579 = vmatpush.msra.mxu0 0.0
  %580 = vmatpush.msra.mxu0 0.0
  %581 = vmatpush.msra.mxu0 0.0
  %582 = vmatpush.msra.mxu0 0.0
  %583 = vmatpush.msra.mxu0 %v492
  %584 = vmatpush.msra.mxu0 %v488
  %585 = vmatpush.msra.mxu0 %v484
  %586 = vmatpush.msra.mxu0 %v480
  %587 = vmatmul.f32.gmra.mxu0 %v509
  %v588 = vpop.f32.mrf.mxu0
  %v589 = vadd.f32 0.0, %v588
  %590 = vdwg.mxu0
  %v591 = vpack.c.bf16 %v529, %v529
  %v592 = vpack.c.bf16 %v549, %v549
  %v593 = vpack.c.bf16 %v569, %v569
  %v594 = vpack.c.bf16 %v589, %v589
  %v595 = vld [vmem:[%s3] sm:$0xf]
  %v596 = vld [vmem:[%s3 + $0x4] sm:$0xf]
  %v597 = vld [vmem:[%s3 + $0x8] sm:$0xf]
  %v598 = vld [vmem:[%s3 + $0xc] sm:$0xf]
  %v599 = vld [vmem:[%s3 + $0x10] sm:$0xf]
  %v600 = vld [vmem:[%s3 + $0x14] sm:$0xf]
  %v601 = vld [vmem:[%s3 + $0x18] sm:$0xf]
  %v602 = vld [vmem:[%s3 + $0x1c] sm:$0xf]
  %v603 = vld [vmem:[%s3 + $0x20] sm:$0xf]
  %v604 = vld [vmem:[%s3 + $0x24] sm:$0xf]
  %v605 = vld [vmem:[%s3 + $0x28] sm:$0xf]
  %v606 = vld [vmem:[%s3 + $0x2c] sm:$0xf]
  %v607 = vld [vmem:[%s3 + $0x30] sm:$0xf]
  %v608 = vld [vmem:[%s3 + $0x34] sm:$0xf]
  %v609 = vld [vmem:[%s3 + $0x38] sm:$0xf]
  %v610 = vld [vmem:[%s3 + $0x3c] sm:$0xf]
  %v611 = vld [vmem:[%s3 + $0x40] sm:$0xf]
  %v612 = vld [vmem:[%s3 + $0x44] sm:$0xf]
  %v613 = vld [vmem:[%s3 + $0x48] sm:$0xf]
  %v614 = vld [vmem:[%s3 + $0x4c] sm:$0xf]
  %v615 = vld [vmem:[%s3 + $0x50] sm:$0xf]
  %v616 = vld [vmem:[%s3 + $0x54] sm:$0xf]
  %v617 = vld [vmem:[%s3 + $0x58] sm:$0xf]
  %v618 = vld [vmem:[%s3 + $0x5c] sm:$0xf]
  %v619 = vld [vmem:[%s3 + $0x60] sm:$0xf]
  %v620 = vld [vmem:[%s3 + $0x64] sm:$0xf]
  %v621 = vld [vmem:[%s3 + $0x68] sm:$0xf]
  %v622 = vld [vmem:[%s3 + $0x6c] sm:$0xf]
  %v623 = vld [vmem:[%s3 + $0x70] sm:$0xf]
  %v624 = vld [vmem:[%s3 + $0x74] sm:$0xf]
  %v625 = vld [vmem:[%s3 + $0x78] sm:$0xf]
  %v626 = vld [vmem:[%s3 + $0x7c] sm:$0xf]
  %v627 = vld [vmem:[%s3 + $0x80] sm:$0xf]
  %v628 = vld [vmem:[%s3 + $0x84] sm:$0xf]
  %v629 = vld [vmem:[%s3 + $0x88] sm:$0xf]
  %v630 = vld [vmem:[%s3 + $0x8c] sm:$0xf]
  %v631 = vld [vmem:[%s3 + $0x90] sm:$0xf]
  %v632 = vld [vmem:[%s3 + $0x94] sm:$0xf]
  %v633 = vld [vmem:[%s3 + $0x98] sm:$0xf]
  %v634 = vld [vmem:[%s3 + $0x9c] sm:$0xf]
  %v635 = vld [vmem:[%s3 + $0xa0] sm:$0xf]
  %v636 = vld [vmem:[%s3 + $0xa4] sm:$0xf]
  %v637 = vld [vmem:[%s3 + $0xa8] sm:$0xf]
  %v638 = vld [vmem:[%s3 + $0xac] sm:$0xf]
  %v639 = vld [vmem:[%s3 + $0xb0] sm:$0xf]
  %v640 = vld [vmem:[%s3 + $0xb4] sm:$0xf]
  %v641 = vld [vmem:[%s3 + $0xb8] sm:$0xf]
  %v642 = vld [vmem:[%s3 + $0xbc] sm:$0xf]
  %v643 = vld [vmem:[%s3 + $0xc0] sm:$0xf]
  %v644 = vld [vmem:[%s3 + $0xc4] sm:$0xf]
  %v645 = vld [vmem:[%s3 + $0xc8] sm:$0xf]
  %v646 = vld [vmem:[%s3 + $0xcc] sm:$0xf]
  %v647 = vld [vmem:[%s3 + $0xd0] sm:$0xf]
  %v648 = vld [vmem:[%s3 + $0xd4] sm:$0xf]
  %v649 = vld [vmem:[%s3 + $0xd8] sm:$0xf]
  %v650 = vld [vmem:[%s3 + $0xdc] sm:$0xf]
  %v651 = vld [vmem:[%s3 + $0xe0] sm:$0xf]
  %v652 = vld [vmem:[%s3 + $0xe4] sm:$0xf]
  %v653 = vld [vmem:[%s3 + $0xe8] sm:$0xf]
  %v654 = vld [vmem:[%s3 + $0xec] sm:$0xf]
  %v655 = vld [vmem:[%s3 + $0xf0] sm:$0xf]
  %v656 = vld [vmem:[%s3 + $0xf4] sm:$0xf]
  %v657 = vld [vmem:[%s3 + $0xf8] sm:$0xf]
  %v658 = vld [vmem:[%s3 + $0xfc] sm:$0xf]
  %v659 = vld [vmem:[%s4] sm:$0x1]
  %v661 = vperm.slane %v659, 0
  %v727 = vunpack.c.l.b16 %v595
  %v728 = vunpack.c.l.b16 %v596
  %v729 = vunpack.c.l.b16 %v597
  %v730 = vunpack.c.l.b16 %v598
  %v731 = vunpack.c.l.b16 %v599
  %v732 = vunpack.c.l.b16 %v600
  %v733 = vunpack.c.l.b16 %v601
  %v734 = vunpack.c.l.b16 %v602
  %v735 = vunpack.c.l.b16 %v603
  %v736 = vunpack.c.l.b16 %v604
  %v737 = vunpack.c.l.b16 %v605
  %v738 = vunpack.c.l.b16 %v606
  %v739 = vunpack.c.l.b16 %v607
  %v740 = vunpack.c.l.b16 %v608
  %v741 = vunpack.c.l.b16 %v609
  %v742 = vunpack.c.l.b16 %v610
  %v743 = vunpack.c.l.b16 %v611
  %v744 = vunpack.c.l.b16 %v612
  %v745 = vunpack.c.l.b16 %v613
  %v746 = vunpack.c.l.b16 %v614
  %v747 = vunpack.c.l.b16 %v615
  %v748 = vunpack.c.l.b16 %v616
  %v749 = vunpack.c.l.b16 %v617
  %v750 = vunpack.c.l.b16 %v618
  %v751 = vunpack.c.l.b16 %v619
  %v752 = vunpack.c.l.b16 %v620
  %v753 = vunpack.c.l.b16 %v621
  %v754 = vunpack.c.l.b16 %v622
  %v755 = vunpack.c.l.b16 %v623
  %v756 = vunpack.c.l.b16 %v624
  %v757 = vunpack.c.l.b16 %v625
  %v758 = vunpack.c.l.b16 %v626
  %v759 = vunpack.c.l.b16 %v627
  %v760 = vunpack.c.l.b16 %v628
  %v761 = vunpack.c.l.b16 %v629
  %v762 = vunpack.c.l.b16 %v630
  %v763 = vunpack.c.l.b16 %v631
  %v764 = vunpack.c.l.b16 %v632
  %v765 = vunpack.c.l.b16 %v633
  %v766 = vunpack.c.l.b16 %v634
  %v767 = vunpack.c.l.b16 %v635
  %v768 = vunpack.c.l.b16 %v636
  %v769 = vunpack.c.l.b16 %v637
  %v770 = vunpack.c.l.b16 %v638
  %v771 = vunpack.c.l.b16 %v639
  %v772 = vunpack.c.l.b16 %v640
  %v773 = vunpack.c.l.b16 %v641
  %v774 = vunpack.c.l.b16 %v642
  %v775 = vunpack.c.l.b16 %v643
  %v776 = vunpack.c.l.b16 %v644
  %v777 = vunpack.c.l.b16 %v645
  %v778 = vunpack.c.l.b16 %v646
  %v779 = vunpack.c.l.b16 %v647
  %v780 = vunpack.c.l.b16 %v648
  %v781 = vunpack.c.l.b16 %v649
  %v782 = vunpack.c.l.b16 %v650
  %v783 = vunpack.c.l.b16 %v651
  %v784 = vunpack.c.l.b16 %v652
  %v785 = vunpack.c.l.b16 %v653
  %v786 = vunpack.c.l.b16 %v654
  %v787 = vunpack.c.l.b16 %v655
  %v788 = vunpack.c.l.b16 %v656
  %v789 = vunpack.c.l.b16 %v657
  %v790 = vunpack.c.l.b16 %v658
  %v791 = vpack.c.b16 %v728, %v727
  %v792 = vpack.c.b16 %v730, %v729
  %v793 = vpack.c.b16 %v732, %v731
  %v794 = vpack.c.b16 %v734, %v733
  %v795 = vpack.c.b16 %v736, %v735
  %v796 = vpack.c.b16 %v738, %v737
  %v797 = vpack.c.b16 %v740, %v739
  %v798 = vpack.c.b16 %v742, %v741
  %v799 = vpack.c.b16 %v744, %v743
  %v800 = vpack.c.b16 %v746, %v745
  %v801 = vpack.c.b16 %v748, %v747
  %v802 = vpack.c.b16 %v750, %v749
  %v803 = vpack.c.b16 %v752, %v751
  %v804 = vpack.c.b16 %v754, %v753
  %v805 = vpack.c.b16 %v756, %v755
  %v806 = vpack.c.b16 %v758, %v757
  %v807 = vpack.c.b16 %v760, %v759
  %v808 = vpack.c.b16 %v762, %v761
  %v809 = vpack.c.b16 %v764, %v763
  %v810 = vpack.c.b16 %v766, %v765
  %v811 = vpack.c.b16 %v768, %v767
  %v812 = vpack.c.b16 %v770, %v769
  %v813 = vpack.c.b16 %v772, %v771
  %v814 = vpack.c.b16 %v774, %v773
  %v815 = vpack.c.b16 %v776, %v775
  %v816 = vpack.c.b16 %v778, %v777
  %v817 = vpack.c.b16 %v780, %v779
  %v818 = vpack.c.b16 %v782, %v781
  %v819 = vpack.c.b16 %v784, %v783
  %v820 = vpack.c.b16 %v786, %v785
  %v821 = vpack.c.b16 %v788, %v787
  %v822 = vpack.c.b16 %v790, %v789
  %855 = vmatpush.bf16.msra.mxu0 %v798
  %856 = vmatpush.bf16.msra.mxu0 %v797
  %857 = vmatpush.bf16.msra.mxu0 %v796
  %858 = vmatpush.bf16.msra.mxu0 %v795
  %859 = vmatpush.bf16.msra.mxu0 %v794
  %860 = vmatpush.bf16.msra.mxu0 %v793
  %861 = vmatpush.bf16.msra.mxu0 %v792
  %862 = vmatpush.bf16.msra.mxu0 %v791
  %863 = vmatmul.bf16.gmra.mxu0 %v591
  %v864 = vpop.f32.mrf.mxu0
  %v865 = vadd.f32 %v661, %v864
  %v866 = vpop.f32.mrf.mxu0
  %867 = vdwg.mxu0
  %868 = vmatpush.bf16.msra.mxu0 %v806
  %869 = vmatpush.bf16.msra.mxu0 %v805
  %870 = vmatpush.bf16.msra.mxu0 %v804
  %871 = vmatpush.bf16.msra.mxu0 %v803
  %872 = vmatpush.bf16.msra.mxu0 %v802
  %873 = vmatpush.bf16.msra.mxu0 %v801
  %874 = vmatpush.bf16.msra.mxu0 %v800
  %875 = vmatpush.bf16.msra.mxu0 %v799
  %876 = vmatmul.bf16.gmra.mxu0 %v592
  %v877 = vpop.f32.mrf.mxu0
  %v878 = vadd.f32 %v865, %v877
  %v879 = vpop.f32.mrf.mxu0
  %880 = vdwg.mxu0
  %881 = vmatpush.bf16.msra.mxu0 %v814
  %882 = vmatpush.bf16.msra.mxu0 %v813
  %883 = vmatpush.bf16.msra.mxu0 %v812
  %884 = vmatpush.bf16.msra.mxu0 %v811
  %885 = vmatpush.bf16.msra.mxu0 %v810
  %886 = vmatpush.bf16.msra.mxu0 %v809
  %887 = vmatpush.bf16.msra.mxu0 %v808
  %888 = vmatpush.bf16.msra.mxu0 %v807
  %889 = vmatmul.bf16.gmra.mxu0 %v593
  %v890 = vpop.f32.mrf.mxu0
  %v891 = vadd.f32 %v878, %v890
  %v892 = vpop.f32.mrf.mxu0
  %893 = vdwg.mxu0
  %894 = vmatpush.bf16.msra.mxu0 %v822
  %895 = vmatpush.bf16.msra.mxu0 %v821
  %896 = vmatpush.bf16.msra.mxu0 %v820
  %897 = vmatpush.bf16.msra.mxu0 %v819
  %898 = vmatpush.bf16.msra.mxu0 %v818
  %899 = vmatpush.bf16.msra.mxu0 %v817
  %900 = vmatpush.bf16.msra.mxu0 %v816
  %901 = vmatpush.bf16.msra.mxu0 %v815
  %902 = vmatmul.bf16.gmra.mxu0 %v594
  %v903 = vpop.f32.mrf.mxu0
  %v904 = vadd.f32 %v891, %v903
  %v905 = vpop.f32.mrf.mxu0
  %906 = vdwg.mxu0
  %907 = vst [vmem:[%s5] sm:$0xff] %v904
  // Predicated region
  $region22: #{en_classifier_forward.1} parent=0 // pred_check
    _
  $region23: #{en_classifier_forward.1} parent=0 // pred_check_branch
    %909 = sbr.rel (0) target = $region25
  $region24: #{en_classifier_forward.1} parent=0 // pred_region
    _
  $region25: #{en_classifier_forward.1} parent=0 // pred_fallthru
    _
  // Predicated region
  $region26: #{en_classifier_forward.1} parent=0 // pred_check
    _
  $region27: #{en_classifier_forward.1} parent=0 // pred_check_branch
    %911 = sbr.rel (0) target = $region29
  $region28: #{en_classifier_forward.1} parent=0 // pred_region
    _
  $region29: #{en_classifier_forward.1} parent=0 // pred_fallthru
    _

</llo_original>
